<compile_context>
chip_gen: v6e
topology: v6e:2x2x1
jax: 0.10.0
libtpu: 0.0.40
codegen_flags: <defaults>
</compile_context>

<pallas_src>
import functools

import jax
import jax.numpy as jnp
from jax.experimental import pallas as pl
from jax.experimental.pallas import tpu as pltpu

_VMEM_LIMIT = 32 * 1024 * 1024   # explicit scoped-VMEM cap (safe on v5e/v6e/v7x)


def _round_up(n, m):
    return ((n + m - 1) // m) * m


# ----------------------------------------------------------------------------
# Optional single-buffering of grid-constant blocks (weights / biases).
# Probed at runtime so the script still runs on Pallas builds that do not
# support pipeline_mode -- a failing probe just falls back to double buffering.
# ----------------------------------------------------------------------------
def _detect_single_buffering():
    try:
        spec = pl.BlockSpec((8, 128), lambda i: (0, 0),
                            pipeline_mode=pl.Buffered(1))

        def _probe(x_ref, o_ref):
            o_ref[...] = x_ref[...] + 1.0

        out = pl.pallas_call(
            _probe,
            out_shape=jax.ShapeDtypeStruct((16, 128), jnp.float32),
            grid=(2,),
            in_specs=[spec],
            out_specs=pl.BlockSpec((8, 128), lambda i: (i, 0)),
        )(jnp.zeros((8, 128), jnp.float32))
        if bool(jnp.all(out == 1.0)):
            return {"pipeline_mode": pl.Buffered(1)}
    except Exception:   # noqa: BLE001 - any failure -> default buffering
        pass
    return {}


_RESIDENT_KW = _detect_single_buffering()


def _resident_spec(shape):
    """Same block every grid step (weights/biases); single-buffer if possible."""
    return pl.BlockSpec(shape, lambda i: (0, 0), **_RESIDENT_KW)


def _choose_tile(M, max_tm):
    """M tiling: no gratuitous row padding, >=2 'parallel' steps when M allows
    (v7x has 2 TensorCores), 16-row alignment for bf16 operand packing."""
    splits = pl.cdiv(M, max_tm)
    if splits == 1 and M >= 32:
        splits = 2
    tm = _round_up(pl.cdiv(M, splits), 16)
    return tm, pl.cdiv(M, tm)


# ----------------------------------------------------------------------------
# Pallas kernels.
# ----------------------------------------------------------------------------
def _conv_matmul_kernel(x_ref, w_ref, b_ref, o_ref):
    # bf16 operands, f32 accumulate, f32 output (inter-layer activations f32).
    acc = jnp.dot(x_ref[...], w_ref[...], preferred_element_type=jnp.float32)
    o_ref[...] = jnp.maximum(acc + b_ref[...], 0.0)


def _fc_head_kernel(x_ref, w1_ref, b1_ref, w2_ref, b2_ref, o_ref):
    # fc1 (ReLU) + fc2 fused: the (tm, 512) hidden activation stays in VMEM.
    h = jnp.dot(x_ref[...], w1_ref[...], preferred_element_type=jnp.float32)
    h = jnp.maximum(h + b1_ref[...], 0.0)
    y = jnp.dot(h.astype(jnp.bfloat16), w2_ref[...],
                preferred_element_type=jnp.float32)
    y = y + b2_ref[...]
    o_ref[...] = y[:, : o_ref.shape[1]]          # drop fc2 padding columns


def conv_matmul(x, w, b, *, max_tm=512):
    """relu(x @ w + b).  x: (M, Kp) bf16, w: (Kp, N) bf16, b: (1, N) f32.
    Output is (M, N) f32 at its exact logical shape; partial edge blocks are
    handled by Pallas' clamped block DMAs (no row padding / slicing)."""
    M, Kp = x.shape
    N = w.shape[1]
    tm, steps = _choose_tile(M, max_tm)
    return pl.pallas_call(
        _conv_matmul_kernel,
        out_shape=jax.ShapeDtypeStruct((M, N), jnp.float32),
        grid=(steps,),
        in_specs=[
            pl.BlockSpec((tm, Kp), lambda i: (i, 0)),
            _resident_spec((Kp, N)),
            _resident_spec((1, N)),
        ],
        out_specs=pl.BlockSpec((tm, N), lambda i: (i, 0)),
        compiler_params=pltpu.CompilerParams(
            dimension_semantics=("parallel",),
            vmem_limit_bytes=_VMEM_LIMIT),
    )(x, w, b)


def fc_head(x, w1, b1, w2, b2, num_options, *, max_tm=128):
    """fc2(relu(fc1(x))).  Tiled over M (parallel) so large replay batches stay
    inside v5e's scoped VMEM and v7x can use both TensorCores."""
    M, K1 = x.shape
    tm, steps = _choose_tile(M, max_tm)
    return pl.pallas_call(
        _fc_head_kernel,
        out_shape=jax.ShapeDtypeStruct((M, num_options), jnp.float32),
        grid=(steps,),
        in_specs=[
            pl.BlockSpec((tm, K1), lambda i: (i, 0)),
            _resident_spec(w1.shape),
            _resident_spec((1, w1.shape[1])),
            _resident_spec(w2.shape),
            _resident_spec((1, w2.shape[1])),
        ],
        out_specs=pl.BlockSpec((tm, num_options), lambda i: (i, 0)),
        compiler_params=pltpu.CompilerParams(
            dimension_semantics=("parallel",),
            vmem_limit_bytes=_VMEM_LIMIT),
    )(x, w1, b1, w2, b2)


# ----------------------------------------------------------------------------
# XLA-side patch extraction (lean: lane-dense slices, bf16, K-pad folded in).
# ----------------------------------------------------------------------------
def _space_to_depth(x, r):
    # (B, H, W, C) -> (B, H//r, W//r, r*r*C); new channel = (p*r + q)*C + c.
    B, H, W, C = x.shape
    x = x.reshape(B, H // r, r, W // r, r, C)
    x = jnp.transpose(x, (0, 1, 3, 2, 4, 5))
    return x.reshape(B, H // r, W // r, r * r * C)


def _im2col_s1(z, kh, kw, k_pad=0):
    # stride-1 im2col on NHWC; column order (i, j, c), optional zero K-padding.
    B, H, W, C = z.shape
    OH, OW = H - kh + 1, W - kw + 1
    cols = [z[:, i:i + OH, j:j + OW, :] for i in range(kh) for j in range(kw)]
    if k_pad:
        cols.append(jnp.zeros((B, OH, OW, k_pad), z.dtype))
    p = jnp.concatenate(cols, axis=-1)
    return p.reshape(B * OH * OW, kh * kw * C + k_pad), OH, OW


# ----------------------------------------------------------------------------
# One-time weight preprocessing (reshape/permute/pad/cast, hoisted out of the
# per-call path).
# ----------------------------------------------------------------------------
def _conv_w_s2d(w, r):
    """Torch conv weight (OC, C, KH, KW), stride r | KH,KW -> matmul weight
    whose rows match the (di, dj, p, q, c) columns of space_to_depth(r) +
    (KH//r x KW//r) stride-1 im2col."""
    OC, C, KH, KW = w.shape
    kr, kc = KH // r, KW // r
    w = jnp.transpose(w, (2, 3, 1, 0))            # [i, j, c, oc]
    w = w.reshape(kr, r, kc, r, C, OC)            # [di, p, dj, q, c, oc]
    w = jnp.transpose(w, (0, 2, 1, 3, 4, 5))      # [di, dj, p, q, c, oc]
    return w.reshape(kr * kc * r * r * C, OC)


def prepare_params(params):
    def bf16(w):
        return w.astype(jnp.bfloat16)

    def bias(b):
        return b.astype(jnp.float32)[None, :]

    c1 = _conv_w_s2d(params["conv1_w"], 4)                     # (256, 32)
    c2 = _conv_w_s2d(params["conv2_w"], 2)                     # (512, 64)
    c3 = jnp.transpose(params["conv3_w"], (2, 3, 1, 0)).reshape(3 * 3 * 64, 64)
    c3 = jnp.pad(c3, ((0, 640 - 576), (0, 0)))                 # K 576 -> 640

    # fc1: torch flattens (C=64, H=7, W=7); our activations flatten (H, W, C),
    # so permute fc1's columns once to match.
    fc1 = jnp.transpose(params["fc1_w"].reshape(-1, 64, 7, 7),
                        (2, 3, 1, 0)).reshape(7 * 7 * 64, -1)  # (3136, 512)
    fc1 = jnp.pad(fc1, ((0, 3200 - 3136), (0, 0)))             # K 3136 -> 3200

    fc2 = params["fc2_w"].T                                    # (512, n_opt)
    n_opt = fc2.shape[1]
    n_pad = _round_up(n_opt, 128)
    fc2 = jnp.pad(fc2, ((0, 0), (0, n_pad - n_opt)))
    b2 = jnp.pad(params["fc2_b"].astype(jnp.float32), (0, n_pad - n_opt))[None, :]

    return {
        "c1_w": bf16(c1), "c1_b": bias(params["conv1_b"]),
        "c2_w": bf16(c2), "c2_b": bias(params["conv2_b"]),
        "c3_w": bf16(c3), "c3_b": bias(params["conv3_b"]),
        "fc1_w": bf16(fc1), "fc1_b": bias(params["fc1_b"]),
        "fc2_w": bf16(fc2), "fc2_b": b2,
    }


# ----------------------------------------------------------------------------
# DQN forward (NCHW input, same math as the PyTorch module).
# ----------------------------------------------------------------------------
def dqn_forward(prep, x, *, num_options):
    x = jnp.transpose(x, (0, 2, 3, 1))                         # NCHW -> NHWC, once
    B = x.shape[0]

    # conv1: 8x8 stride 4  ==  space-to-depth(4) + 2x2 stride-1 conv.
    z = _space_to_depth(x.astype(jnp.bfloat16), 4)             # (B, 21, 21, 64)
    p, OH, OW = _im2col_s1(z, 2, 2)                            # (B*400, 256)
    h = conv_matmul(p, prep["c1_w"], prep["c1_b"]).reshape(B, OH, OW, 32)

    # conv2: 4x4 stride 2  ==  space-to-depth(2) + 2x2 stride-1 conv.
    z = _space_to_depth(h.astype(jnp.bfloat16), 2)             # (B, 10, 10, 128)
    p, OH, OW = _im2col_s1(z, 2, 2)                            # (B*81, 512)
    h = conv_matmul(p, prep["c2_w"], prep["c2_b"]).reshape(B, OH, OW, 64)

    # conv3: 3x3 stride 1 (K padded 576 -> 640 inside the concat).
    p, OH, OW = _im2col_s1(h.astype(jnp.bfloat16), 3, 3, k_pad=64)   # (B*49, 640)
    h = conv_matmul(p, prep["c3_w"], prep["c3_b"])             # (B*49, 64) f32
    h = h.reshape(B, OH * OW * 64)                             # (H, W, C) flatten

    xf = jnp.pad(h.astype(jnp.bfloat16),
                 ((0, 0), (0, prep["fc1_w"].shape[0] - h.shape[1])))
    return fc_head(xf, prep["fc1_w"], prep["fc1_b"],
                   prep["fc2_w"], prep["fc2_b"], num_options)


# ----------------------------------------------------------------------------
# Pure-JAX reference (mirrors the PyTorch module in f32, HIGHEST precision).
# ----------------------------------------------------------------------------
def dqn_reference(params, x):
    dn = ("NCHW", "OIHW", "NCHW")

    def conv(x, w, b, stride):
        y = jax.lax.conv_general_dilated(
            x, w, (stride, stride), "VALID", dimension_numbers=dn,
            precision=jax.lax.Precision.HIGHEST)
        return jax.nn.relu(y + b[None, :, None, None])

    x = conv(x, params["conv1_w"], params["conv1_b"], 4)
    x = conv(x, params["conv2_w"], params["conv2_b"], 2)
    x = conv(x, params["conv3_w"], params["conv3_b"], 1)
    x = x.reshape(x.shape[0], -1)                              # (C, H, W) flatten
    x = jax.nn.relu(jnp.dot(x, params["fc1_w"].T,
                            precision=jax.lax.Precision.HIGHEST)
                    + params["fc1_b"])
    return jnp.dot(x, params["fc2_w"].T,
                   precision=jax.lax.Precision.HIGHEST) + params["fc2_b"]


# ----------------------------------------------------------------------------
# Deterministic parameter init (PyTorch-shaped weights).
# ----------------------------------------------------------------------------
def init_params(key, num_options):
    def uniform(key, shape, fan_in):
        bound = 1.0 / jnp.sqrt(fan_in)
        return jax.random.uniform(key, shape, jnp.float32, -bound, bound)

    ks = jax.random.split(key, 10)
    return {
        "conv1_w": uniform(ks[0], (32, 4, 8, 8), 4 * 8 * 8),
        "conv1_b": uniform(ks[1], (32,), 4 * 8 * 8),
        "conv2_w": uniform(ks[2], (64, 32, 4, 4), 32 * 4 * 4),
        "conv2_b": uniform(ks[3], (64,), 32 * 4 * 4),
        "conv3_w": uniform(ks[4], (64, 64, 3, 3), 64 * 3 * 3),
        "conv3_b": uniform(ks[5], (64,), 64 * 3 * 3),
        "fc1_w": uniform(ks[6], (512, 7 * 7 * 64), 7 * 7 * 64),
        "fc1_b": uniform(ks[7], (512,), 7 * 7 * 64),
        "fc2_w": uniform(ks[8], (num_options, 512), 512),
        "fc2_b": uniform(ks[9], (num_options,), 512),
    }


if __name__ == "__main__":
    num_options = 6
    batch = 2

    key = jax.random.PRNGKey(0)
    k_params, k_x = jax.random.split(key)
    params = init_params(k_params, num_options)
    prep = jax.jit(prepare_params)(params)                     # one-time weight prep
    jax.block_until_ready(prep)

    # 84x84 spatial is implied by fc1's 7*7*64 input features.
    x = jax.random.normal(k_x, (batch, 4, 84, 84), jnp.float32)

    fwd = jax.jit(functools.partial(dqn_forward, num_options=num_options))
    out = fwd(prep, x)
    jax.block_until_ready(out)

    assert out.shape == (batch, num_options), out.shape
    assert out.dtype == jnp.float32

    ref = jax.jit(dqn_reference)(params, x)
    jax.block_until_ready(ref)
    # Only bf16 matmul-operand rounding (f32 accumulation) separates the two.
    assert jnp.allclose(out, ref, rtol=5e-2, atol=2e-2), \
        float(jnp.max(jnp.abs(out - ref)))

    print("KERNEL_OK")
</pallas_src>

<mosaic_0001>
module attributes {stable_mosaic.version = 11 : i64} {
  func.func @_probe(%arg0: i32, %arg1: memref<8x128xf32, #tpu.memory_space<vmem>>, %arg2: memref<8x128xf32, #tpu.memory_space<vmem>>) attributes {dimension_semantics = [#tpu.dimension_semantics<arbitrary>], iteration_bounds = array<i64: 2>, scalar_prefetch = 0 : i64, scratch_operands = 0 : i64, tpu.core_type = #tpu.core_type<tc>, window_params = [{pipeline_mode = #tpu.pipeline_mode<synchronous>, transform_indices = @transform_0, window_bounds = array<i64: 8, 128>}, {transform_indices = @transform_1, window_bounds = array<i64: 8, 128>}]} {
    %c0 = arith.constant 0 : index
    %c0_0 = arith.constant 0 : index
    %0 = vector.load %arg1[%c0, %c0_0] : memref<8x128xf32, #tpu.memory_space<vmem>>, vector<8x128xf32>
    %cst = arith.constant 1.000000e+00 : f32
    %1 = vector.broadcast %cst : f32 to vector<8x128xf32>
    %2 = arith.addf %0, %1 : vector<8x128xf32>
    %c0_1 = arith.constant 0 : index
    %c0_2 = arith.constant 0 : index
    %3 = vector.load %arg2[%c0_1, %c0_2] : memref<8x128xf32, #tpu.memory_space<vmem>>, vector<8x128xf32>
    tpu.vector_store %arg2[%c0_1, %c0_2], %2 {strides = array<i32>} : memref<8x128xf32, #tpu.memory_space<vmem>>, vector<8x128xf32>,
    return
  }
  func.func @transform_0(%arg0: i32) -> (i32, i32) {
    %c0_i32 = arith.constant 0 : i32
    %c0_i32_0 = arith.constant 0 : i32
    %c0_i32_1 = arith.constant 0 : i32
    return %c0_i32, %c0_i32_0 : i32, i32
  }
  func.func @transform_1(%arg0: i32) -> (i32, i32) {
    %c0_i32 = arith.constant 0 : i32
    %c0_i32_0 = arith.constant 0 : i32
    return %arg0, %c0_i32 : i32, i32
  }
}

</mosaic_0001>

<llo_original>
// kernel: tpu_custom_call.1
$region0: #{tpu_custom_call.1}
  #allocation0 [shape = 'u32[]', space=smem, size = 0x4, offset = 0x4, fixed_abs, tag = 'smem constant byte address 0x4 - core index']
  #allocation1 [shape = 'u32[144,128]{1,0:T(1,128)}', space=vmem, size = 0x12000, scoped, tag = 'internal scratch']
  %s0 = inlined_call_operand.hbm [shape: f32[8,128], index: 0, kind: input, shape index: {}]
  %s1 = inlined_call_operand.hbm [shape: f32[16,128], index: 1, kind: output, shape index: {}]
  %s2 = sld [smem:[#allocation0]]
  $region41: #{tpu_custom_call.1} parent=0
    _
  %s4 = ssub.s32 1, %s2
  %s5 = scalar_select 0, %s4, %s2
  $region1: #{tpu_custom_call.1} parent=0
    #allocation2 [shape = 'u8[4096]{0}', space=vmem, size = 0x1000, scoped, tag = 'input window, operand 0, single buffered']
    #allocation3 [shape = 's32[2]{0}', space=sflag, size = 0x8, scoped, tag = 'scoped memory for tpu_custom_call.1']
    #allocation4 [shape = 's32[2]{0}', space=sflag, size = 0x8, scoped, tag = 'scoped memory for tpu_custom_call.1']
    #allocation5 [shape = 'u8[8192]{0}', space=vmem, size = 0x2000, scoped, tag = 'output window, operand 0']
    %6 = vsyncpa [#allocation3], 0
    %7 = vsyncpa [#allocation4], 0
    %s8 = scalar_lea.sflag [#allocation4], 1
    %9 = vsyncpa %s8, 0
    loop: start=0, step=1, limit=4
    $region2: #{tpu_custom_call.1} parent=1 // loop_pre_header
      _
    $region3: #{tpu_custom_call.1} parent=1 // loop_header
      %s11 = sphi 0, %s15
      %p12 = scmp.ge.s32.totalorder %s11, 4
      %s19 = sphi 0, %s19
      %s21 = sphi 0, %s19
      %s22 = sphi 0, %s21
      %s36 = sphi 0, %s22
      %s42 = sphi 0, %s44
      %s45 = sphi 0, %s42
      %s46 = sphi 0, %s45
      %s62 = sphi 0, %s46
    $region4: #{tpu_custom_call.1} parent=1 // loop_header_branch
      %14 = sbr.rel (%p12) target = $region8
    $region5: #{tpu_custom_call.1} parent=1 // loop_body
      %s16 = ssub.s32 %s11, 1
      %s17 = ssub.s32 %s11, 2
      %s18 = sadd.s32 %s11, 1
      %s20 = sadd.s32 %s19, 1
      %p23 = scmp.eq.s32.totalorder %s11, 1
      %p24 = scmp.ne.s32.totalorder %s19, %s21
      %p25 = scmp.eq.s32.totalorder %s11, 0
      %p26 = por %p24, %p25
      %p27 = scmp.ne.s32.totalorder %s19, %s21
      %p28 = scmp.eq.s32.totalorder %s16, 1
      %p29 = por %p27, %p28
      %p30 = scmp.ne.s32.totalorder %s21, %s22
      %p31 = scmp.eq.s32.totalorder %s16, 0
      %p32 = por %p30, %p31
      %p33 = scmp.ne.s32.totalorder %s21, %s22
      %p34 = scmp.eq.s32.totalorder %s17, 1
      %p35 = por %p33, %p34
      %p37 = scmp.ne.s32.totalorder %s22, %s36
      %p38 = scmp.eq.s32.totalorder %s17, 0
      %p39 = por %p37, %p38
      %s40 = ssub.s32 %s11, %s18
      %p41 = scmp.eq.s32.totalorder %s40, 0
      %s43 = sadd.s32 %s42, 1
      %s44 = scalar_select %p41, %s42, %s43
      %p47 = pneg %p41
      %p48 = scmp.eq.s32.totalorder %s11, 1
      %p49 = por %p47, %p48
      %p50 = scmp.ne.s32.totalorder %s42, %s45
      %p51 = scmp.eq.s32.totalorder %s11, 0
      %p52 = por %p50, %p51
      %p53 = scmp.ne.s32.totalorder %s42, %s45
      %p54 = scmp.eq.s32.totalorder %s16, 1
      %p55 = por %p53, %p54
      %p56 = scmp.ne.s32.totalorder %s45, %s46
      %p57 = scmp.eq.s32.totalorder %s16, 0
      %p58 = por %p56, %p57
      %p59 = scmp.ne.s32.totalorder %s45, %s46
      %p60 = scmp.eq.s32.totalorder %s17, 1
      %p61 = por %p59, %p60
      %p63 = scmp.ne.s32.totalorder %s46, %s62
      %p64 = scmp.eq.s32.totalorder %s17, 0
      %p65 = por %p63, %p64
      %p66 = scmp.le.s32.totalorder 1, %s11
      %p67 = scmp.lt.s32.totalorder %s11, 3
      %p68 = pnand %p66, %p67
      %p69 = pneg %p68
      // Predicated region
      $region9: #{tpu_custom_call.1} parent=5 // pred_check
        _
      $region10: #{tpu_custom_call.1} parent=5 // pred_check_branch
        %71 = sbr.rel (%p68) target = $region12
      $region11: #{tpu_custom_call.1} parent=5 // pred_region
        %s72 = ssub.s32 %s11, 1
        // Predicated region
        $region13: #{tpu_custom_call.1} parent=11 // pred_check
          %p73 = pneg %p32
        $region14: #{tpu_custom_call.1} parent=11 // pred_check_branch
          %75 = sbr.rel (%p73) target = $region16
        $region15: #{tpu_custom_call.1} parent=11 // pred_region
          %s77 = ssub.s32 128, 128
          %78 = vsyncadd [#allocation3], %s77
          %s80 = sshll.u32 [#allocation2], 4
          %s81 = int_to_ptr.vmem [resolvable:$true] %s80
          %83 = dma.hbm_to_vmem [thread:$0]  %s0, 128, %s81, [#allocation3]
        $region16: #{tpu_custom_call.1} parent=11 // pred_fallthru
          _
      $region12: #{tpu_custom_call.1} parent=5 // pred_fallthru
        _
      %p84 = scmp.lt.s32.totalorder %s11, 2
      // Predicated region
      $region17: #{tpu_custom_call.1} parent=5 // pred_check
        %p85 = pneg %p84
      $region18: #{tpu_custom_call.1} parent=5 // pred_check_branch
        %87 = sbr.rel (%p85) target = $region20
      $region19: #{tpu_custom_call.1} parent=5 // pred_region
        _
      $region20: #{tpu_custom_call.1} parent=5 // pred_fallthru
        _
      %p88 = scmp.le.s32.totalorder 1, %s11
      %p89 = scmp.lt.s32.totalorder %s11, 3
      %p90 = pnand %p88, %p89
      %p91 = pneg %p90
      // Predicated region
      $region21: #{tpu_custom_call.1} parent=5 // pred_check
        _
      $region22: #{tpu_custom_call.1} parent=5 // pred_check_branch
        %93 = sbr.rel (%p90) target = $region24
      $region23: #{tpu_custom_call.1} parent=5 // pred_region
        %s94 = ssub.s32 %s11, 1
        // Predicated region
        $region25: #{tpu_custom_call.1} parent=23 // pred_check
          %p95 = pneg %p32
        $region26: #{tpu_custom_call.1} parent=23 // pred_check_branch
          %97 = sbr.rel (%p95) target = $region28
        $region27: #{tpu_custom_call.1} parent=23 // pred_region
          %98 = dma.done [#allocation3], 128
        $region28: #{tpu_custom_call.1} parent=23 // pred_fallthru
          _
        %p99 = pneg %p32
        %p100 = pneg %p29
        %p101 = pneg %p58
        %p102 = pneg %p55
        %s103 = sand.u32 %s45, 1
        %s104 = scalar_lea.sflag [#allocation4], %s103
        %s105 = sand.u32 %s45, 1
        %s106 = smul.addr %s105, 8
        %s107 = scalar_lea.vmem [#allocation5], %s106
        %v108 = vld [vmem:[#allocation2] sm:$0xff]
        %v109 = vadd.f32 %v108, 1.0
        %110 = vst [vmem:[%s107] sm:$0xff] %v109
        %s111 = sand.u32 %s45, 1
        %s112 = scalar_lea.sflag [#allocation4], %s111
        %s113 = sand.u32 %s45, 1
        %s114 = smul.addr %s113, 8
        %s115 = scalar_lea.vmem [#allocation5], %s114
        // Predicated region
        $region29: #{tpu_custom_call.1} parent=23 // pred_check
          %p116 = pneg %p55
        $region30: #{tpu_custom_call.1} parent=23 // pred_check_branch
          %118 = sbr.rel (%p116) target = $region32
        $region31: #{tpu_custom_call.1} parent=23 // pred_region
          %s120 = ssub.s32 128, 128
          %121 = vsyncadd %s112, %s120
          %s122 = smul.addr %s16, 128
          %s123 = scalar_lea.hbm %s1, %s122
          %s125 = sshll.u32 %s115, 4
          %s126 = int_to_ptr.vmem [resolvable:$true] %s125
          %128 = dma.vmem_to_hbm [thread:$0]  %s126, 128, %s123, %s112
        $region32: #{tpu_custom_call.1} parent=23 // pred_fallthru
          _
      $region24: #{tpu_custom_call.1} parent=5 // pred_fallthru
        _
      %p129 = scmp.le.s32.totalorder 2, %s11
      // Predicated region
      $region33: #{tpu_custom_call.1} parent=5 // pred_check
        %p130 = pneg %p129
      $region34: #{tpu_custom_call.1} parent=5 // pred_check_branch
        %132 = sbr.rel (%p130) target = $region36
      $region35: #{tpu_custom_call.1} parent=5 // pred_region
        %s133 = ssub.s32 %s11, 2
        // Predicated region
        $region37: #{tpu_custom_call.1} parent=35 // pred_check
          %p134 = pneg %p61
        $region38: #{tpu_custom_call.1} parent=35 // pred_check_branch
          %136 = sbr.rel (%p134) target = $region40
        $region39: #{tpu_custom_call.1} parent=35 // pred_region
          %s137 = sand.u32 %s46, 1
          %s138 = scalar_lea.sflag [#allocation4], %s137
          %s139 = sand.u32 %s46, 1
          %s140 = smul.addr %s139, 8
          %s141 = scalar_lea.vmem [#allocation5], %s140
          %142 = dma.done %s138, 128
        $region40: #{tpu_custom_call.1} parent=35 // pred_fallthru
          _
      $region36: #{tpu_custom_call.1} parent=5 // pred_fallthru
        _
    $region6: #{tpu_custom_call.1} parent=1 // loop_footer
      %s15 = sadd.s32 1, %s11
    $region7: #{tpu_custom_call.1} parent=1 // loop_footer_branch
      %10 = sbr.rel target = $region3
    $region8: #{tpu_custom_call.1} parent=1 // loop_exit
      _
    %143 = vsyncpa [#allocation3], 1
    %s144 = scalar_lea.sflag [#allocation3], 1
    %145 = vsyncpa %s144, 1
    %146 = vsyncpa [#allocation4], 1
    %s147 = scalar_lea.sflag [#allocation4], 1
    %148 = vsyncpa %s147, 1

</llo_original>
